<compile_context>
chip_gen: v7x
topology: tpu7x:2x2x1
jax: 0.10.0
libtpu: 0.0.40
codegen_flags: <defaults>
</compile_context>

<pallas_src>
import math
import functools

import jax
import jax.numpy as jnp
from jax.experimental import pallas as pl
from jax.experimental.pallas import tpu as pltpu


# ----------------------------------------------------------------------------
# Parameter / buffer construction (glue, plain JAX)
# ----------------------------------------------------------------------------
def make_pe_table(d_model: int, max_len: int = 5000, dtype=jnp.float32):
    """Replicates the `pe` buffer of PositionalEncoding.__init__ -> (max_len, 1, d_model)."""
    position = jnp.arange(max_len, dtype=jnp.float32)[:, None]              # (L, 1)
    div_term = jnp.exp(
        jnp.arange(0, d_model, 2, dtype=jnp.float32) * (-math.log(10000.0) / d_model)
    )                                                                        # (D/2,)
    pe = jnp.zeros((max_len, d_model), dtype=jnp.float32)
    pe = pe.at[:, 0::2].set(jnp.sin(position * div_term))
    pe = pe.at[:, 1::2].set(jnp.cos(position * div_term))
    # pe.unsqueeze(0).transpose(0, 1)  ->  (max_len, 1, d_model)
    return pe[:, None, :].astype(dtype)


# ----------------------------------------------------------------------------
# Kernels
# ----------------------------------------------------------------------------
def _pos_enc_prng_kernel(seed_ref, x_ref, pe_ref, o_ref, *, dropout_p, use_dropout):
    # x_ref: (ts, tb, D) tile of x;  pe_ref: (ts, 1, D) tile of pe.
    # pe broadcasts over the batch (middle) axis in the add.
    y = x_ref[...] + pe_ref[...]

    if use_dropout:
        # Inverted dropout (torch.nn.Dropout train-mode semantics), drawn from
        # the TPU hardware PRNG.  Multi-operand seed -> independent per-block
        # streams with no collisions across adjacent seeds.
        pltpu.prng_seed(seed_ref[0], pl.program_id(0), pl.program_id(1))
        bits = pltpu.prng_random_bits(y.shape)
        if bits.dtype != jnp.int32:
            bits = pltpu.bitcast(bits, jnp.int32)
        # Integer-domain keep test: bits uniform over int32, so
        # P(bits >= thresh) == 1 - p with thresh = round(p * 2^32) - 2^31.
        thresh = int(round(dropout_p * (1 << 32))) - (1 << 31)
        thresh = max(-(1 << 31), min(thresh, (1 << 31) - 1))
        keep = bits >= jnp.int32(thresh)
        y = jnp.where(keep, y * (1.0 / (1.0 - dropout_p)), jnp.zeros_like(y))

    o_ref[...] = y.astype(o_ref.dtype)


def _pos_enc_mask_kernel(x_ref, pe_ref, m_ref, o_ref):
    # Fallback dropout path (non-TPU backends / interpret mode): the keep/scale
    # mask (0 or 1/(1-p), f32) is generated on the host and streamed in.
    y = (x_ref[...] + pe_ref[...]) * m_ref[...]
    o_ref[...] = y.astype(o_ref.dtype)


# ----------------------------------------------------------------------------
# Tile selection (VMEM-budget aware, generation-safe)
# ----------------------------------------------------------------------------
def _choose_tiles(S, B, D, itemsize, x_tile_budget=2 << 20):
    """Pick (ts, tb) for (ts, tb, D) blocks of an (S, B, D) array.

    ~2 MiB x tile.  Working set: 2x x (double-buffered) + 2x out + pe tile +
    int32 PRNG bits + f32 intermediates ~= 6-7x the x tile ~= 12-14 MiB, which
    fits the smallest default scoped-VMEM limit (v5e 16 MiB) and leaves large
    headroom on v6e/v7x (32 MiB scoped; v7x physical is only 64 MiB, so do not
    size against v6e's 128 MiB).
    """
    # Batch tile: keep the sublane dim either a multiple of 8 or the full B
    # (the (8,128) divisibility rule applies to the last two block dims).
    if B <= 8 or (B % 8) != 0:
        tb = B
    else:
        tb = 8
    row_bytes = tb * D * itemsize
    ts = x_tile_budget // max(1, row_bytes)
    ts = max(8, (ts // 8) * 8)
    ts = min(ts, S)
    return ts, tb


# ----------------------------------------------------------------------------
# Wrapper
# ----------------------------------------------------------------------------
def positional_encoding_forward(x, pe, *, dropout_p=0.1, training=False,
                                seed=0, block_seq=None, block_batch=None,
                                alias_out_to_x=False):
    """x: (S, B, D); pe: (max_len, 1, D). Returns dropout(x + pe[:S]).

    `alias_out_to_x=True` writes the output in place over x's buffer
    (input_output_aliases); enable it only when the caller also donates x
    (jit(..., donate_argnums=...)), otherwise XLA inserts a defensive copy.
    """
    dropout_p = float(dropout_p)
    assert 0.0 <= dropout_p < 1.0, dropout_p
    S, B, D = x.shape
    itemsize = jnp.dtype(x.dtype).itemsize

    ts, tb = _choose_tiles(S, B, D, itemsize)
    if block_seq is not None:
        ts = max(1, min(int(block_seq), S))
    if block_batch is not None:
        tb = max(1, min(int(block_batch), B))

    # No transposes: tile the original (S, B, D) layout directly.  pe is kept
    # in x's dtype so the add does not promote and the pe DMA stays narrow.
    pe_slice = pe[:S].astype(x.dtype)               # (S, 1, D)
    out_shape = jax.ShapeDtypeStruct((S, B, D), x.dtype)

    # Batch axis innermost -> pe block index unchanged across it (DMA reuse);
    # both axes "parallel" -> shardable across v7x's two TensorCores.
    grid = (pl.cdiv(S, ts), pl.cdiv(B, tb))
    compiler_params = pltpu.CompilerParams(
        dimension_semantics=("parallel", "parallel"))

    use_dropout = bool(training) and dropout_p > 0.0
    on_tpu = jax.default_backend() == "tpu"

    if use_dropout and not on_tpu:
        # Interpret / CPU fallback: the TPU hardware PRNG is unavailable, so
        # build the inverted-dropout scale mask on the host.
        key = jax.random.PRNGKey(seed)
        keep = jax.random.bernoulli(key, 1.0 - dropout_p, (S, B, D))
        mask = keep.astype(jnp.float32) * (1.0 / (1.0 - dropout_p))
        grid_spec = pltpu.PrefetchScalarGridSpec(
            num_scalar_prefetch=0,
            grid=grid,
            in_specs=[
                pl.BlockSpec((ts, tb, D), lambda i, j: (i, j, 0)),   # x
                pl.BlockSpec((ts, 1, D), lambda i, j: (i, 0, 0)),    # pe
                pl.BlockSpec((ts, tb, D), lambda i, j: (i, j, 0)),   # mask
            ],
            out_specs=pl.BlockSpec((ts, tb, D), lambda i, j: (i, j, 0)),
        )
        return pl.pallas_call(
            _pos_enc_mask_kernel,
            out_shape=out_shape,
            grid_spec=grid_spec,
            compiler_params=compiler_params,
            input_output_aliases=({0: 0} if alias_out_to_x else {}),
        )(x, pe_slice, mask)

    seed_arr = jnp.asarray([seed], dtype=jnp.int32)     # scalar-prefetch seed
    kernel = functools.partial(_pos_enc_prng_kernel,
                               dropout_p=dropout_p,
                               use_dropout=use_dropout)
    grid_spec = pltpu.PrefetchScalarGridSpec(
        num_scalar_prefetch=1,
        grid=grid,
        in_specs=[
            pl.BlockSpec((ts, tb, D), lambda i, j, s: (i, j, 0)),    # x
            pl.BlockSpec((ts, 1, D), lambda i, j, s: (i, 0, 0)),     # pe
        ],
        out_specs=pl.BlockSpec((ts, tb, D), lambda i, j, s: (i, j, 0)),
    )
    # arg 0 is the prefetched seed; arg 1 is the real x -> true in-place alias.
    return pl.pallas_call(
        kernel,
        out_shape=out_shape,
        grid_spec=grid_spec,
        compiler_params=compiler_params,
        input_output_aliases=({1: 0} if alias_out_to_x else {}),
    )(seed_arr, x, pe_slice)


# ----------------------------------------------------------------------------
# Demo / self-check
# ----------------------------------------------------------------------------
if __name__ == "__main__":
    S, B, D = 64, 8, 128          # lane-dense D, sublane-dense batch tile
    MAX_LEN = 128
    P_DROP = 0.25

    key = jax.random.PRNGKey(0)
    x = jax.random.normal(key, (S, B, D), dtype=jnp.float32)
    pe = make_pe_table(D, max_len=MAX_LEN, dtype=x.dtype)

    # Small explicit seq tile so the demo exercises a multi-step grid.
    fwd_eval = jax.jit(functools.partial(
        positional_encoding_forward, dropout_p=P_DROP, training=False,
        block_seq=16))
    out = jax.block_until_ready(fwd_eval(x, pe))

    ref = x + pe[:S]
    assert out.shape == (S, B, D)
    assert jnp.allclose(out, ref, atol=1e-6, rtol=1e-6)

    # Training mode: inverted-dropout path (TPU hardware PRNG on TPU backends,
    # host-generated mask otherwise).
    fwd_train = jax.jit(functools.partial(
        positional_encoding_forward, dropout_p=P_DROP, training=True,
        seed=123, block_seq=16))
    out_tr = jax.block_until_ready(fwd_train(x, pe))

    kept = out_tr != 0
    # Every surviving element equals (x + pe) / (1 - p); dropped ones are 0.
    assert bool(jnp.all(
        jnp.where(kept, jnp.abs(out_tr * (1.0 - P_DROP) - ref), 0.0) < 1e-4))
    keep_frac = float(jnp.mean(kept.astype(jnp.float32)))
    assert 0.5 < keep_frac < 0.95, keep_frac

    print("KERNEL_OK")
</pallas_src>

<mosaic_0001>
module attributes {stable_mosaic.version = 11 : i64} {
  func.func @_pos_enc_prng_kernel(%arg0: i32, %arg1: i32, %arg2: memref<1xi32, #tpu.memory_space<smem>>, %arg3: memref<16x8x128xf32, #tpu.memory_space<vmem>>, %arg4: memref<16x1x128xf32, #tpu.memory_space<vmem>>, %arg5: memref<16x8x128xf32, #tpu.memory_space<vmem>>) attributes {dimension_semantics = [#tpu.dimension_semantics<parallel>, #tpu.dimension_semantics<parallel>], iteration_bounds = array<i64: 4, 1>, scalar_prefetch = 1 : i64, scratch_operands = 0 : i64, tpu.core_type = #tpu.core_type<tc>, window_params = [{transform_indices = @transform_0, window_bounds = array<i64: 16, 8, 128>}, {transform_indices = @transform_1, window_bounds = array<i64: 16, 1, 128>}, {transform_indices = @transform_2, window_bounds = array<i64: 16, 8, 128>}]} {
    %c0 = arith.constant 0 : index
    %c0_0 = arith.constant 0 : index
    %c0_1 = arith.constant 0 : index
    %0 = vector.load %arg3[%c0, %c0_0, %c0_1] : memref<16x8x128xf32, #tpu.memory_space<vmem>>, vector<16x8x128xf32>
    %c0_2 = arith.constant 0 : index
    %c0_3 = arith.constant 0 : index
    %c0_4 = arith.constant 0 : index
    %1 = vector.load %arg4[%c0_2, %c0_3, %c0_4] : memref<16x1x128xf32, #tpu.memory_space<vmem>>, vector<16x1x128xf32>
    %2 = vector.broadcast %1 : vector<16x1x128xf32> to vector<16x8x128xf32>
    %3 = arith.addf %0, %2 : vector<16x8x128xf32>
    %c0_5 = arith.constant 0 : index
    %c0_6 = arith.constant 0 : index
    %c0_7 = arith.constant 0 : index
    %4 = vector.load %arg5[%c0_5, %c0_6, %c0_7] : memref<16x8x128xf32, #tpu.memory_space<vmem>>, vector<16x8x128xf32>
    tpu.vector_store %arg5[%c0_5, %c0_6, %c0_7], %3 {strides = array<i32>} : memref<16x8x128xf32, #tpu.memory_space<vmem>>, vector<16x8x128xf32>,
    return
  }
  func.func @transform_0(%arg0: i32, %arg1: i32, %arg2: memref<1xi32, #tpu.memory_space<smem>>) -> (i32, i32, i32) {
    %c0_i32 = arith.constant 0 : i32
    %c0_i32_0 = arith.constant 0 : i32
    return %arg0, %arg1, %c0_i32 : i32, i32, i32
  }
  func.func @transform_1(%arg0: i32, %arg1: i32, %arg2: memref<1xi32, #tpu.memory_space<smem>>) -> (i32, i32, i32) {
    %c0_i32 = arith.constant 0 : i32
    %c0_i32_0 = arith.constant 0 : i32
    %c0_i32_1 = arith.constant 0 : i32
    return %arg0, %c0_i32, %c0_i32_0 : i32, i32, i32
  }
  func.func @transform_2(%arg0: i32, %arg1: i32, %arg2: memref<1xi32, #tpu.memory_space<smem>>) -> (i32, i32, i32) {
    %c0_i32 = arith.constant 0 : i32
    %c0_i32_0 = arith.constant 0 : i32
    return %arg0, %arg1, %c0_i32 : i32, i32, i32
  }
}

</mosaic_0001>

<llo_original>
// kernel: positional_encoding_forward.1
$region0: #{positional_encoding_forward.1}
  #allocation0 [shape = 'u32[]', space=smem, size = 0x4, offset = 0x4, fixed_abs, tag = 'smem constant byte address 0x4 - core index']
  #allocation1 [shape = 'u32[144,128]{1,0:T(1,128)}', space=vmem, size = 0x12000, scoped, tag = 'internal scratch']
  #allocation2 [shape = 's32[1]{0}', space=sflag, size = 0x4, scoped, tag = 'scoped memory for positional_encoding_forward.1']
  #allocation3 [shape = 's32[1]{0:T(128)S(6)}', space=smem, size = 0x200, scoped, tag = 'prefetched SMEM operand 0']
  %s0 = inlined_call_operand.<no memory space> [shape: s32[1], index: 0, kind: input, shape index: {}]
  %s1 = inlined_call_operand.hbm [shape: f32[64,8,128], index: 1, kind: input, shape index: {}]
  %s2 = inlined_call_operand.vmem [shape: f32[64,1,128], index: 2, kind: input, shape index: {}]
  %s3 = inlined_call_operand.hbm [shape: f32[64,8,128], index: 3, kind: output, shape index: {}]
  %s4 = sld [smem:[#allocation0]]
  $region45: #{positional_encoding_forward.1} parent=0
    _
  %s6 = ssub.s32 1, %s4
  %s7 = scalar_select 0, %s6, %s4
  %8 = sst [smem:[#allocation3]] %s0
  $region1: #{positional_encoding_forward.1} parent=0
    #allocation4 [shape = 'u8[131072]{0}', space=vmem, size = 0x20000, scoped, tag = 'input window, operand 1']
    #allocation5 [shape = 's32[2]{0}', space=sflag, size = 0x8, scoped, tag = 'scoped memory for positional_encoding_forward.1']
    #allocation6 [shape = 's32[2]{0}', space=sflag, size = 0x8, scoped, tag = 'scoped memory for positional_encoding_forward.1']
    #allocation7 [shape = 'u8[131072]{0}', space=vmem, size = 0x20000, scoped, tag = 'output window, operand 0']
    %9 = vsyncpa [#allocation5], 0
    %s10 = scalar_lea.sflag [#allocation5], 1
    %11 = vsyncpa %s10, 0
    %12 = vsyncpa [#allocation6], 0
    %s13 = scalar_lea.sflag [#allocation6], 1
    %14 = vsyncpa %s13, 0
    loop: start=0, step=1, limit=6
    $region2: #{positional_encoding_forward.1} parent=1 // loop_pre_header
      _
    $region3: #{positional_encoding_forward.1} parent=1 // loop_header
      %s16 = sphi 0, %s20
      %p17 = scmp.ge.s32.totalorder %s16, 6
      %s23 = sphi 0, %s35
      %s24 = sphi 0, %s31
      %s25 = sphi 0, %s23
      %s26 = sphi 0, %s24
      %s27 = sphi 0, %s25
      %s28 = sphi 0, %s26
      %s40 = sphi 0, %s42
      %s43 = sphi 0, %s40
      %s44 = sphi 0, %s43
      %s60 = sphi 0, %s44
      %s66 = sphi 0, %s68
      %s69 = sphi 0, %s66
      %s70 = sphi 0, %s69
      %s86 = sphi 0, %s70
      %s94 = sphi 0, %s96
      %s97 = sphi 0, %s94
      %s98 = sphi 0, %s97
      %s114 = sphi 0, %s98
    $region4: #{positional_encoding_forward.1} parent=1 // loop_header_branch
      %19 = sbr.rel (%p17) target = $region8
    $region5: #{positional_encoding_forward.1} parent=1 // loop_body
      %s21 = ssub.s32 %s16, 1
      %s22 = ssub.s32 %s16, 2
      %s29 = sadd.s32 1, %s24
      %p30 = scmp.ge.s32.totalorder %s29, 1
      %s31 = scalar_select %p30, 0, %s29
      %s32 = sadd.s32 1, %s23
      %s33 = scalar_select %p30, %s32, %s23
      %p34 = scmp.ge.s32.totalorder %s33, 4
      %s35 = scalar_select %p34, 0, %s33
      %s36 = ssub.s32 %s23, %s35
      %s37 = ssub.s32 %s24, %s31
      %s38 = sor.u32 %s36, %s37
      %p39 = scmp.eq.s32.totalorder %s38, 0
      %s41 = sadd.s32 %s40, 1
      %s42 = scalar_select %p39, %s40, %s41
      %p45 = pneg %p39
      %p46 = scmp.eq.s32.totalorder %s16, 3
      %p47 = por %p45, %p46
      %p48 = scmp.ne.s32.totalorder %s40, %s43
      %p49 = scmp.eq.s32.totalorder %s16, 0
      %p50 = por %p48, %p49
      %p51 = scmp.ne.s32.totalorder %s40, %s43
      %p52 = scmp.eq.s32.totalorder %s21, 3
      %p53 = por %p51, %p52
      %p54 = scmp.ne.s32.totalorder %s43, %s44
      %p55 = scmp.eq.s32.totalorder %s21, 0
      %p56 = por %p54, %p55
      %p57 = scmp.ne.s32.totalorder %s43, %s44
      %p58 = scmp.eq.s32.totalorder %s22, 3
      %p59 = por %p57, %p58
      %p61 = scmp.ne.s32.totalorder %s44, %s60
      %p62 = scmp.eq.s32.totalorder %s22, 0
      %p63 = por %p61, %p62
      %s64 = ssub.s32 %s23, %s35
      %p65 = scmp.eq.s32.totalorder %s64, 0
      %s67 = sadd.s32 %s66, 1
      %s68 = scalar_select %p65, %s66, %s67
      %p71 = pneg %p65
      %p72 = scmp.eq.s32.totalorder %s16, 3
      %p73 = por %p71, %p72
      %p74 = scmp.ne.s32.totalorder %s66, %s69
      %p75 = scmp.eq.s32.totalorder %s16, 0
      %p76 = por %p74, %p75
      %p77 = scmp.ne.s32.totalorder %s66, %s69
      %p78 = scmp.eq.s32.totalorder %s21, 3
      %p79 = por %p77, %p78
      %p80 = scmp.ne.s32.totalorder %s69, %s70
      %p81 = scmp.eq.s32.totalorder %s21, 0
      %p82 = por %p80, %p81
      %p83 = scmp.ne.s32.totalorder %s69, %s70
      %p84 = scmp.eq.s32.totalorder %s22, 3
      %p85 = por %p83, %p84
      %p87 = scmp.ne.s32.totalorder %s70, %s86
      %p88 = scmp.eq.s32.totalorder %s22, 0
      %p89 = por %p87, %p88
      %s90 = ssub.s32 %s23, %s35
      %s91 = ssub.s32 %s24, %s31
      %s92 = sor.u32 %s90, %s91
      %p93 = scmp.eq.s32.totalorder %s92, 0
      %s95 = sadd.s32 %s94, 1
      %s96 = scalar_select %p93, %s94, %s95
      %p99 = pneg %p93
      %p100 = scmp.eq.s32.totalorder %s16, 3
      %p101 = por %p99, %p100
      %p102 = scmp.ne.s32.totalorder %s94, %s97
      %p103 = scmp.eq.s32.totalorder %s16, 0
      %p104 = por %p102, %p103
      %p105 = scmp.ne.s32.totalorder %s94, %s97
      %p106 = scmp.eq.s32.totalorder %s21, 3
      %p107 = por %p105, %p106
      %p108 = scmp.ne.s32.totalorder %s97, %s98
      %p109 = scmp.eq.s32.totalorder %s21, 0
      %p110 = por %p108, %p109
      %p111 = scmp.ne.s32.totalorder %s97, %s98
      %p112 = scmp.eq.s32.totalorder %s22, 3
      %p113 = por %p111, %p112
      %p115 = scmp.ne.s32.totalorder %s98, %s114
      %p116 = scmp.eq.s32.totalorder %s22, 0
      %p117 = por %p115, %p116
      %p118 = scmp.le.s32.totalorder 1, %s16
      %p119 = scmp.lt.s32.totalorder %s16, 5
      %p120 = pnand %p118, %p119
      %p121 = pneg %p120
      // Predicated region
      $region9: #{positional_encoding_forward.1} parent=5 // pred_check
        _
      $region10: #{positional_encoding_forward.1} parent=5 // pred_check_branch
        %123 = sbr.rel (%p120) target = $region12
      $region11: #{positional_encoding_forward.1} parent=5 // pred_region
        %s124 = ssub.s32 %s16, 1
      $region12: #{positional_encoding_forward.1} parent=5 // pred_fallthru
        _
      %p125 = scmp.lt.s32.totalorder %s16, 4
      // Predicated region
      $region13: #{positional_encoding_forward.1} parent=5 // pred_check
        %p126 = pneg %p125
      $region14: #{positional_encoding_forward.1} parent=5 // pred_check_branch
        %128 = sbr.rel (%p126) target = $region16
      $region15: #{positional_encoding_forward.1} parent=5 // pred_region
        // Predicated region
        $region17: #{positional_encoding_forward.1} parent=15 // pred_check
          %p129 = pneg %p50
        $region18: #{positional_encoding_forward.1} parent=15 // pred_check_branch
          %131 = sbr.rel (%p129) target = $region20
        $region19: #{positional_encoding_forward.1} parent=15 // pred_region
          %s132 = sand.u32 %s40, 1
          %s133 = scalar_lea.sflag [#allocation5], %s132
          %s134 = sand.u32 %s40, 1
          %s135 = smul.addr %s134, 128
          %s136 = scalar_lea.vmem [#allocation4], %s135
          %s137 = smul.u32 16, %s23
          %s139 = ssub.s32 2048, 2048
          %140 = vsyncadd %s133, %s139
          %s141 = sadd.s32 %s24, %s137
          %s142 = smul.addr %s141, 128
          %s143 = scalar_lea.hbm %s1, %s142
          %s144 = sshll.u32 %s136, 4
          %s145 = int_to_ptr.vmem [resolvable:$true] %s144
          %150 = dma.hbm_to_vmem [thread:$0]  %s143, 2048, %s145, %s133, 128, 128, 8
        $region20: #{positional_encoding_forward.1} parent=15 // pred_fallthru
          _
        // Predicated region
        $region21: #{positional_encoding_forward.1} parent=15 // pred_check
          %p151 = pneg %p76
        $region22: #{positional_encoding_forward.1} parent=15 // pred_check_branch
          %153 = sbr.rel (%p151) target = $region24
        $region23: #{positional_encoding_forward.1} parent=15 // pred_region
          %s154 = smul.u32 16, %s23
          %p155 = scmp.lt.s32.totalorder %s154, 63
          %s156 = scalar_select %p155, %s154, 63
          %s157 = scalar_lea.vmem %s2, %s156
          %s158 = smul.u32 16, %s23
        $region24: #{positional_encoding_forward.1} parent=15 // pred_fallthru
          _
      $region16: #{positional_encoding_forward.1} parent=5 // pred_fallthru
        _
      %p159 = scmp.le.s32.totalorder 1, %s16
      %p160 = scmp.lt.s32.totalorder %s16, 5
      %p161 = pnand %p159, %p160
      %p162 = pneg %p161
      // Predicated region
      $region25: #{positional_encoding_forward.1} parent=5 // pred_check
        _
      $region26: #{positional_encoding_forward.1} parent=5 // pred_check_branch
        %164 = sbr.rel (%p161) target = $region28
      $region27: #{positional_encoding_forward.1} parent=5 // pred_region
        %s165 = ssub.s32 %s16, 1
        %s166 = sand.u32 %s43, 1
        %s167 = scalar_lea.sflag [#allocation5], %s166
        %s168 = sand.u32 %s43, 1
        %s169 = smul.addr %s168, 128
        %s170 = scalar_lea.vmem [#allocation4], %s169
        // Predicated region
        $region29: #{positional_encoding_forward.1} parent=27 // pred_check
          %p171 = pneg %p56
        $region30: #{positional_encoding_forward.1} parent=27 // pred_check_branch
          %173 = sbr.rel (%p171) target = $region32
        $region31: #{positional_encoding_forward.1} parent=27 // pred_region
          %174 = dma.done %s167, 2048
        $region32: #{positional_encoding_forward.1} parent=27 // pred_fallthru
          _
        %s175 = sand.u32 %s43, 1
        %s176 = scalar_lea.sflag [#allocation5], %s175
        %s177 = sand.u32 %s43, 1
        %s178 = smul.addr %s177, 128
        %s179 = scalar_lea.vmem [#allocation4], %s178
        %p180 = pneg %p56
        %p181 = pneg %p53
        %s182 = smul.u32 16, %s25
        %p183 = scmp.lt.s32.totalorder %s182, 63
        %s184 = scalar_select %p183, %s182, 63
        %s185 = scalar_lea.vmem %s2, %s184
        %p186 = pneg %p82
        %p187 = pneg %p79
        %p188 = pneg %p110
        %p189 = pneg %p107
        %s190 = sand.u32 %s97, 1
        %s191 = scalar_lea.sflag [#allocation6], %s190
        %s192 = sand.u32 %s97, 1
        %s193 = smul.addr %s192, 128
        %s194 = scalar_lea.vmem [#allocation7], %s193
        %s195 = smul.u32 16, %s25
        %s196 = smul.u32 16, %s25
        %p197 = scmp.lt.s32.totalorder %s196, 63
        %s198 = scalar_select %p197, %s196, 63
        %s199 = scalar_lea.vmem %s2, %s198
        %s200 = smul.u32 16, %s25
        %s201 = smul.u32 16, %s25
        %v202 = vld [vmem:[%s170] sm:$0xff]
        %v203 = vld [vmem:[%s170 + $0x8] sm:$0xff]
        %v204 = vld [vmem:[%s170 + $0x10] sm:$0xff]
        %v205 = vld [vmem:[%s170 + $0x18] sm:$0xff]
        %v206 = vld [vmem:[%s170 + $0x20] sm:$0xff]
        %v207 = vld [vmem:[%s170 + $0x28] sm:$0xff]
        %v208 = vld [vmem:[%s170 + $0x30] sm:$0xff]
        %v209 = vld [vmem:[%s170 + $0x38] sm:$0xff]
        %v210 = vld [vmem:[%s170 + $0x40] sm:$0xff]
        %v211 = vld [vmem:[%s170 + $0x48] sm:$0xff]
        %v212 = vld [vmem:[%s170 + $0x50] sm:$0xff]
        %v213 = vld [vmem:[%s170 + $0x58] sm:$0xff]
        %v214 = vld [vmem:[%s170 + $0x60] sm:$0xff]
        %v215 = vld [vmem:[%s170 + $0x68] sm:$0xff]
        %v216 = vld [vmem:[%s170 + $0x70] sm:$0xff]
        %v217 = vld [vmem:[%s170 + $0x78] sm:$0xff]
        %v218 = vld [vmem:[%s199] sm:$0x1]
        %v219 = vld [vmem:[%s199 + $0x1] sm:$0x1]
        %v220 = vld [vmem:[%s199 + $0x2] sm:$0x1]
        %v221 = vld [vmem:[%s199 + $0x3] sm:$0x1]
        %v222 = vld [vmem:[%s199 + $0x4] sm:$0x1]
        %v223 = vld [vmem:[%s199 + $0x5] sm:$0x1]
        %v224 = vld [vmem:[%s199 + $0x6] sm:$0x1]
        %v225 = vld [vmem:[%s199 + $0x7] sm:$0x1]
        %v226 = vld [vmem:[%s199 + $0x8] sm:$0x1]
        %v227 = vld [vmem:[%s199 + $0x9] sm:$0x1]
        %v228 = vld [vmem:[%s199 + $0xa] sm:$0x1]
        %v229 = vld [vmem:[%s199 + $0xb] sm:$0x1]
        %v230 = vld [vmem:[%s199 + $0xc] sm:$0x1]
        %v231 = vld [vmem:[%s199 + $0xd] sm:$0x1]
        %v232 = vld [vmem:[%s199 + $0xe] sm:$0x1]
        %v233 = vld [vmem:[%s199 + $0xf] sm:$0x1]
        %v250 = vlaneseq
        %v251 = vshrl.u32 %v250, 7
        %v252 = vsub.s32 0, %v251
        %v253 = vrot.slane %v218, %v252
        %v254 = vlaneseq
        %v255 = vshrl.u32 %v254, 7
        %v256 = vsub.s32 0, %v255
        %v257 = vrot.slane %v219, %v256
        %v258 = vlaneseq
        %v259 = vshrl.u32 %v258, 7
        %v260 = vsub.s32 0, %v259
        %v261 = vrot.slane %v220, %v260
        %v262 = vlaneseq
        %v263 = vshrl.u32 %v262, 7
        %v264 = vsub.s32 0, %v263
        %v265 = vrot.slane %v221, %v264
        %v266 = vlaneseq
        %v267 = vshrl.u32 %v266, 7
        %v268 = vsub.s32 0, %v267
        %v269 = vrot.slane %v222, %v268
        %v270 = vlaneseq
        %v271 = vshrl.u32 %v270, 7
        %v272 = vsub.s32 0, %v271
        %v273 = vrot.slane %v223, %v272
        %v274 = vlaneseq
        %v275 = vshrl.u32 %v274, 7
        %v276 = vsub.s32 0, %v275
        %v277 = vrot.slane %v224, %v276
        %v278 = vlaneseq
        %v279 = vshrl.u32 %v278, 7
        %v280 = vsub.s32 0, %v279
        %v281 = vrot.slane %v225, %v280
        %v282 = vlaneseq
        %v283 = vshrl.u32 %v282, 7
        %v284 = vsub.s32 0, %v283
        %v285 = vrot.slane %v226, %v284
        %v286 = vlaneseq
        %v287 = vshrl.u32 %v286, 7
        %v288 = vsub.s32 0, %v287
        %v289 = vrot.slane %v227, %v288
        %v290 = vlaneseq
        %v291 = vshrl.u32 %v290, 7
        %v292 = vsub.s32 0, %v291
        %v293 = vrot.slane %v228, %v292
        %v294 = vlaneseq
        %v295 = vshrl.u32 %v294, 7
        %v296 = vsub.s32 0, %v295
        %v297 = vrot.slane %v229, %v296
        %v298 = vlaneseq
        %v299 = vshrl.u32 %v298, 7
        %v300 = vsub.s32 0, %v299
        %v301 = vrot.slane %v230, %v300
        %v302 = vlaneseq
        %v303 = vshrl.u32 %v302, 7
        %v304 = vsub.s32 0, %v303
        %v305 = vrot.slane %v231, %v304
        %v306 = vlaneseq
        %v307 = vshrl.u32 %v306, 7
        %v308 = vsub.s32 0, %v307
        %v309 = vrot.slane %v232, %v308
        %v310 = vlaneseq
        %v311 = vshrl.u32 %v310, 7
        %v312 = vsub.s32 0, %v311
        %v313 = vrot.slane %v233, %v312
        %v330 = vadd.f32 %v202, %v253
        %v331 = vadd.f32 %v203, %v257
        %v332 = vadd.f32 %v204, %v261
        %v333 = vadd.f32 %v205, %v265
        %v334 = vadd.f32 %v206, %v269
        %v335 = vadd.f32 %v207, %v273
        %v336 = vadd.f32 %v208, %v277
        %v337 = vadd.f32 %v209, %v281
        %v338 = vadd.f32 %v210, %v285
        %v339 = vadd.f32 %v211, %v289
        %v340 = vadd.f32 %v212, %v293
        %v341 = vadd.f32 %v213, %v297
        %v342 = vadd.f32 %v214, %v301
        %v343 = vadd.f32 %v215, %v305
        %v344 = vadd.f32 %v216, %v309
        %v345 = vadd.f32 %v217, %v313
        %346 = vst [vmem:[%s194] sm:$0xff] %v330
        %347 = vst [vmem:[%s194 + $0x8] sm:$0xff] %v331
        %348 = vst [vmem:[%s194 + $0x10] sm:$0xff] %v332
        %349 = vst [vmem:[%s194 + $0x18] sm:$0xff] %v333
        %350 = vst [vmem:[%s194 + $0x20] sm:$0xff] %v334
        %351 = vst [vmem:[%s194 + $0x28] sm:$0xff] %v335
        %352 = vst [vmem:[%s194 + $0x30] sm:$0xff] %v336
        %353 = vst [vmem:[%s194 + $0x38] sm:$0xff] %v337
        %354 = vst [vmem:[%s194 + $0x40] sm:$0xff] %v338
        %355 = vst [vmem:[%s194 + $0x48] sm:$0xff] %v339
        %356 = vst [vmem:[%s194 + $0x50] sm:$0xff] %v340
        %357 = vst [vmem:[%s194 + $0x58] sm:$0xff] %v341
        %358 = vst [vmem:[%s194 + $0x60] sm:$0xff] %v342
        %359 = vst [vmem:[%s194 + $0x68] sm:$0xff] %v343
        %360 = vst [vmem:[%s194 + $0x70] sm:$0xff] %v344
        %361 = vst [vmem:[%s194 + $0x78] sm:$0xff] %v345
        %s362 = sand.u32 %s97, 1
        %s363 = scalar_lea.sflag [#allocation6], %s362
        %s364 = sand.u32 %s97, 1
        %s365 = smul.addr %s364, 128
        %s366 = scalar_lea.vmem [#allocation7], %s365
        // Predicated region
        $region33: #{positional_encoding_forward.1} parent=27 // pred_check
          %p367 = pneg %p107
        $region34: #{positional_encoding_forward.1} parent=27 // pred_check_branch
          %369 = sbr.rel (%p367) target = $region36
        $region35: #{positional_encoding_forward.1} parent=27 // pred_region
          %s370 = smul.u32 16, %s25
          %s372 = ssub.s32 2048, 2048
          %373 = vsyncadd %s363, %s372
          %s374 = sadd.s32 %s26, %s370
          %s375 = smul.addr %s374, 128
          %s376 = scalar_lea.hbm %s3, %s375
          %s377 = sshll.u32 %s366, 4
          %s378 = int_to_ptr.vmem [resolvable:$true] %s377
          %383 = dma.vmem_to_hbm [thread:$0]  %s378, 2048, %s376, %s363, 128, 128, 8
        $region36: #{positional_encoding_forward.1} parent=27 // pred_fallthru
          _
      $region28: #{positional_encoding_forward.1} parent=5 // pred_fallthru
        _
      %p384 = scmp.le.s32.totalorder 2, %s16
      // Predicated region
      $region37: #{positional_encoding_forward.1} parent=5 // pred_check
        %p385 = pneg %p384
      $region38: #{positional_encoding_forward.1} parent=5 // pred_check_branch
        %387 = sbr.rel (%p385) target = $region40
      $region39: #{positional_encoding_forward.1} parent=5 // pred_region
        %s388 = ssub.s32 %s16, 2
        // Predicated region
        $region41: #{positional_encoding_forward.1} parent=39 // pred_check
          %p389 = pneg %p113
        $region42: #{positional_encoding_forward.1} parent=39 // pred_check_branch
          %391 = sbr.rel (%p389) target = $region44
        $region43: #{positional_encoding_forward.1} parent=39 // pred_region
          %s392 = sand.u32 %s98, 1
          %s393 = scalar_lea.sflag [#allocation6], %s392
          %s394 = sand.u32 %s98, 1
          %s395 = smul.addr %s394, 128
          %s396 = scalar_lea.vmem [#allocation7], %s395
          %397 = dma.done %s393, 2048
        $region44: #{positional_encoding_forward.1} parent=39 // pred_fallthru
          _
      $region40: #{positional_encoding_forward.1} parent=5 // pred_fallthru
        _
    $region6: #{positional_encoding_forward.1} parent=1 // loop_footer
      %s20 = sadd.s32 1, %s16
    $region7: #{positional_encoding_forward.1} parent=1 // loop_footer_branch
      %15 = sbr.rel target = $region3
    $region8: #{positional_encoding_forward.1} parent=1 // loop_exit
      _
    %398 = vsyncpa [#allocation5], 1
    %s399 = scalar_lea.sflag [#allocation5], 1
    %400 = vsyncpa %s399, 1
    %401 = vsyncpa [#allocation6], 1
    %s402 = scalar_lea.sflag [#allocation6], 1
    %403 = vsyncpa %s402, 1

</llo_original>
